<compile_context>
chip_gen: v6e
topology: v6e:2x2x1
jax: 0.10.0
libtpu: 0.0.40
codegen_flags: <defaults>
</compile_context>

<pallas_src>
import jax
import jax.numpy as jnp
from jax.experimental import pallas as pl
from jax.experimental.pallas import tpu as pltpu

NOISE_DIM = 256
IMAGE_DIM = 28 * 28 * 1          # 784 (not a multiple of 128; full-dim block is fine)
H1, H1_PAD = 64, 128             # hidden 1, padded to a full lane width
H2 = 128                         # hidden 2 (already aligned)


def _leaky_relu(x, slope=0.1):
    return jnp.where(x > 0, x, slope * x)


def generator_kernel(x_ref, w1_ref, b1_ref, w2_ref, b2_ref, w3_ref, b3_ref, o_ref):
    # In-kernel f32 -> bf16 cast (VPU pack, hidden under the input DMA).
    x = x_ref[...].astype(jnp.bfloat16)

    # Every matmul accumulates in f32 on the MXU.
    h1 = jnp.dot(x, w1_ref[...], preferred_element_type=jnp.float32)
    h1 = _leaky_relu(h1 + b1_ref[...])                       # f32 VPU math

    h2 = jnp.dot(h1.astype(jnp.bfloat16), w2_ref[...],
                 preferred_element_type=jnp.float32)
    h2 = _leaky_relu(h2 + b2_ref[...])

    # W3/b3 are native 784 wide: no wasted tanh / store work on padding.
    h3 = jnp.dot(h2.astype(jnp.bfloat16), w3_ref[...],
                 preferred_element_type=jnp.float32)
    o_ref[...] = jnp.tanh(h3 + b3_ref[...]).astype(o_ref.dtype)


def prepare_params(params):
    """One-time: cast weights to bf16 and zero-pad the 64-wide hidden layer.

    Padded H1 columns of W1/b1 are zero -> leaky_relu(0) = 0, and the matching
    rows of W2 are zero, so the padding is numerically inert.  W3/b3 stay at
    their native 784 width (the kernel writes (B, 784) directly).
    """
    w1, b1, w2, b2, w3, b3 = params
    w1p = jnp.zeros((NOISE_DIM, H1_PAD), jnp.bfloat16).at[:, :H1].set(
        w1.astype(jnp.bfloat16))
    b1p = jnp.zeros((1, H1_PAD), jnp.float32).at[:, :H1].set(b1)
    w2p = jnp.zeros((H1_PAD, H2), jnp.bfloat16).at[:H1, :].set(
        w2.astype(jnp.bfloat16))
    b2p = b2.astype(jnp.float32)
    w3p = w3.astype(jnp.bfloat16)
    b3p = b3.astype(jnp.float32)
    return (w1p, b1p, w2p, b2p, w3p, b3p)


def _pick_tm(B):
    """Batch-tile size: big enough to fill MXU rows / amortize the ~0.35us
    per-step pipeline overhead, small enough to stay well inside scoped VMEM
    on every generation (incl. v7x's 64 MiB), and guaranteeing >=2 grid steps
    once B >= 256 so v7x megacore can shard the "parallel" axis."""
    if B < 256:
        return B                              # single tile for small batches
    cap = min(512, B // 2)                    # >= 2 grid steps
    # Prefer multiples of 128 (fills 128/256-row MXU), fall back to mult. of 8.
    for step in (128, 8):
        start = cap - (cap % step)
        for tm in range(start, 0, -step):
            if B % tm == 0:
                return tm
    return B


def generator_forward(x, padded_params, *, tm=None):
    """x: (B, NOISE_DIM) float32. Returns (B, IMAGE_DIM) float32."""
    w1, b1, w2, b2, w3, b3 = padded_params
    B, nd = x.shape
    assert nd == NOISE_DIM

    if tm is None:
        tm = _pick_tm(B)
    assert B % tm == 0, "batch must be divisible by the batch tile size"
    grid = (B // tm,)

    in_specs = [
        pl.BlockSpec((tm, NOISE_DIM), lambda i: (i, 0)),      # x tile (f32)
        pl.BlockSpec((NOISE_DIM, H1_PAD), lambda i: (0, 0)),  # W1 (bf16)
        pl.BlockSpec((1, H1_PAD), lambda i: (0, 0)),          # b1 (f32)
        pl.BlockSpec((H1_PAD, H2), lambda i: (0, 0)),         # W2 (bf16)
        pl.BlockSpec((1, H2), lambda i: (0, 0)),              # b2 (f32)
        pl.BlockSpec((H2, IMAGE_DIM), lambda i: (0, 0)),      # W3 (bf16)
        pl.BlockSpec((1, IMAGE_DIM), lambda i: (0, 0)),       # b3 (f32)
    ]
    out_specs = pl.BlockSpec((tm, IMAGE_DIM), lambda i: (i, 0))

    # Advisory cost hint for XLA's scheduler (784-wide, f32-in/f32-out).
    flops = 2 * B * (NOISE_DIM * H1_PAD + H1_PAD * H2 + H2 * IMAGE_DIM)
    transcendentals = B * IMAGE_DIM
    weight_bytes = ((w1.size + w2.size + w3.size) * 2
                    + (b1.size + b2.size + b3.size) * 4)
    bytes_accessed = B * NOISE_DIM * 4 + B * IMAGE_DIM * 4 + weight_bytes
    cost = pl.CostEstimate(flops=flops, transcendentals=transcendentals,
                           bytes_accessed=bytes_accessed)

    out = pl.pallas_call(
        generator_kernel,
        out_shape=jax.ShapeDtypeStruct((B, IMAGE_DIM), jnp.float32),
        grid_spec=pltpu.PrefetchScalarGridSpec(
            num_scalar_prefetch=0,
            grid=grid,
            in_specs=in_specs,
            out_specs=out_specs,
        ),
        compiler_params=pltpu.CompilerParams(
            dimension_semantics=("parallel",),
            vmem_limit_bytes=32 * 1024 * 1024,
        ),
        cost_estimate=cost,
    )(x, w1, b1, w2, b2, w3, b3)

    return out


def init_params(key):
    """Deterministic init mirroring nn.Linear default U(-1/sqrt(fan_in), +)."""
    ks = jax.random.split(key, 6)

    def linear(kw, kb, fan_in, fan_out):
        bound = 1.0 / jnp.sqrt(jnp.float32(fan_in))
        w = jax.random.uniform(kw, (fan_in, fan_out), jnp.float32, -bound, bound)
        b = jax.random.uniform(kb, (1, fan_out), jnp.float32, -bound, bound)
        return w, b

    w1, b1 = linear(ks[0], ks[1], NOISE_DIM, H1)
    w2, b2 = linear(ks[2], ks[3], H1, H2)
    w3, b3 = linear(ks[4], ks[5], H2, IMAGE_DIM)
    return (w1, b1, w2, b2, w3, b3)


def reference_forward(x, params):
    w1, b1, w2, b2, w3, b3 = params
    h1 = _leaky_relu(x @ w1 + b1)
    h2 = _leaky_relu(h1 @ w2 + b2)
    return jnp.tanh(h2 @ w3 + b3)


if __name__ == "__main__":
    key = jax.random.PRNGKey(0)
    k_param, k_x = jax.random.split(key)

    raw_params = init_params(k_param)
    params = prepare_params(raw_params)

    B = 16  # small demo: tm = B -> single grid step
    x = jax.random.normal(k_x, (B, NOISE_DIM), jnp.float32)

    out = jax.block_until_ready(generator_forward(x, params))

    ref = reference_forward(x, raw_params)
    assert out.shape == (B, IMAGE_DIM)
    # bf16 matmul inputs (f32 accumulation) -> loosened tolerance vs f32 ref.
    assert jnp.allclose(out, ref, atol=3e-2, rtol=3e-2)

    print("KERNEL_OK")
</pallas_src>

<mosaic_0001>
module attributes {stable_mosaic.version = 11 : i64} {
  func.func @generator_kernel(%arg0: i32, %arg1: memref<16x256xf32, #tpu.memory_space<vmem>>, %arg2: memref<256x128xbf16, #tpu.memory_space<vmem>>, %arg3: memref<1x128xf32, #tpu.memory_space<vmem>>, %arg4: memref<128x128xbf16, #tpu.memory_space<vmem>>, %arg5: memref<1x128xf32, #tpu.memory_space<vmem>>, %arg6: memref<128x784xbf16, #tpu.memory_space<vmem>>, %arg7: memref<1x784xf32, #tpu.memory_space<vmem>>, %arg8: memref<16x784xf32, #tpu.memory_space<vmem>>) attributes {dimension_semantics = [#tpu.dimension_semantics<parallel>], iteration_bounds = array<i64: 1>, scalar_prefetch = 0 : i64, scratch_operands = 0 : i64, tpu.core_type = #tpu.core_type<tc>, window_params = [{transform_indices = @transform_0, window_bounds = array<i64: 16, 256>}, {pipeline_mode = #tpu.pipeline_mode<synchronous>, transform_indices = @transform_1, window_bounds = array<i64: 256, 128>}, {pipeline_mode = #tpu.pipeline_mode<synchronous>, transform_indices = @transform_2, window_bounds = array<i64: 1, 128>}, {pipeline_mode = #tpu.pipeline_mode<synchronous>, transform_indices = @transform_3, window_bounds = array<i64: 128, 128>}, {pipeline_mode = #tpu.pipeline_mode<synchronous>, transform_indices = @transform_4, window_bounds = array<i64: 1, 128>}, {pipeline_mode = #tpu.pipeline_mode<synchronous>, transform_indices = @transform_5, window_bounds = array<i64: 128, 784>}, {pipeline_mode = #tpu.pipeline_mode<synchronous>, transform_indices = @transform_6, window_bounds = array<i64: 1, 784>}, {transform_indices = @transform_7, window_bounds = array<i64: 16, 784>}]} {
    %c0 = arith.constant 0 : index
    %c0_0 = arith.constant 0 : index
    %0 = vector.load %arg1[%c0, %c0_0] : memref<16x256xf32, #tpu.memory_space<vmem>>, vector<16x256xf32>
    %1 = arith.truncf %0 : vector<16x256xf32> to vector<16x256xbf16>
    %c0_1 = arith.constant 0 : index
    %c0_2 = arith.constant 0 : index
    %2 = vector.load %arg2[%c0_1, %c0_2] : memref<256x128xbf16, #tpu.memory_space<vmem>>, vector<256x128xbf16>
    %cst = arith.constant dense<0.000000e+00> : vector<16x128xf32>
    %3 = tpu.matmul %1, %2, %cst {dimension_numbers = #tpu.dot_dimension_numbers<[1], [0], [0], [1], [0, 0, 1, 1], [], []>} : vector<16x256xbf16>, vector<256x128xbf16>, vector<16x128xf32> -> vector<16x128xf32>
    %c0_3 = arith.constant 0 : index
    %c0_4 = arith.constant 0 : index
    %4 = vector.load %arg3[%c0_3, %c0_4] : memref<1x128xf32, #tpu.memory_space<vmem>>, vector<1x128xf32>
    %5 = vector.broadcast %4 : vector<1x128xf32> to vector<16x128xf32>
    %6 = arith.addf %3, %5 : vector<16x128xf32>
    %cst_5 = arith.constant 0.000000e+00 : f32
    %7 = vector.broadcast %cst_5 : f32 to vector<16x128xf32>
    %8 = arith.cmpf ogt, %6, %7 : vector<16x128xf32>
    %cst_6 = arith.constant 1.000000e-01 : f32
    %9 = vector.broadcast %cst_6 : f32 to vector<16x128xf32>
    %10 = arith.mulf %9, %6 : vector<16x128xf32>
    %11 = arith.select %8, %6, %10 : vector<16x128xi1>, vector<16x128xf32>
    %12 = arith.truncf %11 : vector<16x128xf32> to vector<16x128xbf16>
    %c0_7 = arith.constant 0 : index
    %c0_8 = arith.constant 0 : index
    %13 = vector.load %arg4[%c0_7, %c0_8] : memref<128x128xbf16, #tpu.memory_space<vmem>>, vector<128x128xbf16>
    %cst_9 = arith.constant dense<0.000000e+00> : vector<16x128xf32>
    %14 = tpu.matmul %12, %13, %cst_9 {dimension_numbers = #tpu.dot_dimension_numbers<[1], [0], [0], [1], [0, 0, 1, 1], [], []>} : vector<16x128xbf16>, vector<128x128xbf16>, vector<16x128xf32> -> vector<16x128xf32>
    %c0_10 = arith.constant 0 : index
    %c0_11 = arith.constant 0 : index
    %15 = vector.load %arg5[%c0_10, %c0_11] : memref<1x128xf32, #tpu.memory_space<vmem>>, vector<1x128xf32>
    %16 = vector.broadcast %15 : vector<1x128xf32> to vector<16x128xf32>
    %17 = arith.addf %14, %16 : vector<16x128xf32>
    %cst_12 = arith.constant 0.000000e+00 : f32
    %18 = vector.broadcast %cst_12 : f32 to vector<16x128xf32>
    %19 = arith.cmpf ogt, %17, %18 : vector<16x128xf32>
    %cst_13 = arith.constant 1.000000e-01 : f32
    %20 = vector.broadcast %cst_13 : f32 to vector<16x128xf32>
    %21 = arith.mulf %20, %17 : vector<16x128xf32>
    %22 = arith.select %19, %17, %21 : vector<16x128xi1>, vector<16x128xf32>
    %23 = arith.truncf %22 : vector<16x128xf32> to vector<16x128xbf16>
    %c0_14 = arith.constant 0 : index
    %c0_15 = arith.constant 0 : index
    %24 = vector.load %arg6[%c0_14, %c0_15] : memref<128x784xbf16, #tpu.memory_space<vmem>>, vector<128x784xbf16>
    %cst_16 = arith.constant dense<0.000000e+00> : vector<16x784xf32>
    %25 = tpu.matmul %23, %24, %cst_16 {dimension_numbers = #tpu.dot_dimension_numbers<[1], [0], [0], [1], [0, 0, 1, 1], [], []>} : vector<16x128xbf16>, vector<128x784xbf16>, vector<16x784xf32> -> vector<16x784xf32>
    %c0_17 = arith.constant 0 : index
    %c0_18 = arith.constant 0 : index
    %26 = vector.load %arg7[%c0_17, %c0_18] : memref<1x784xf32, #tpu.memory_space<vmem>>, vector<1x784xf32>
    %27 = vector.broadcast %26 : vector<1x784xf32> to vector<16x784xf32>
    %28 = arith.addf %25, %27 : vector<16x784xf32>
    %29 = math.tanh %28 : vector<16x784xf32>
    %c0_19 = arith.constant 0 : index
    %c0_20 = arith.constant 0 : index
    %30 = vector.load %arg8[%c0_19, %c0_20] : memref<16x784xf32, #tpu.memory_space<vmem>>, vector<16x784xf32>
    tpu.vector_store %arg8[%c0_19, %c0_20], %29 {strides = array<i32>} : memref<16x784xf32, #tpu.memory_space<vmem>>, vector<16x784xf32>,
    return
  }
  func.func @transform_0(%arg0: i32) -> (i32, i32) {
    %c0_i32 = arith.constant 0 : i32
    %c0_i32_0 = arith.constant 0 : i32
    return %arg0, %c0_i32 : i32, i32
  }
  func.func @transform_1(%arg0: i32) -> (i32, i32) {
    %c0_i32 = arith.constant 0 : i32
    %c0_i32_0 = arith.constant 0 : i32
    %c0_i32_1 = arith.constant 0 : i32
    return %c0_i32, %c0_i32_0 : i32, i32
  }
  func.func @transform_2(%arg0: i32) -> (i32, i32) {
    %c0_i32 = arith.constant 0 : i32
    %c0_i32_0 = arith.constant 0 : i32
    %c0_i32_1 = arith.constant 0 : i32
    return %c0_i32, %c0_i32_0 : i32, i32
  }
  func.func @transform_3(%arg0: i32) -> (i32, i32) {
    %c0_i32 = arith.constant 0 : i32
    %c0_i32_0 = arith.constant 0 : i32
    %c0_i32_1 = arith.constant 0 : i32
    return %c0_i32, %c0_i32_0 : i32, i32
  }
  func.func @transform_4(%arg0: i32) -> (i32, i32) {
    %c0_i32 = arith.constant 0 : i32
    %c0_i32_0 = arith.constant 0 : i32
    %c0_i32_1 = arith.constant 0 : i32
    return %c0_i32, %c0_i32_0 : i32, i32
  }
  func.func @transform_5(%arg0: i32) -> (i32, i32) {
    %c0_i32 = arith.constant 0 : i32
    %c0_i32_0 = arith.constant 0 : i32
    %c0_i32_1 = arith.constant 0 : i32
    return %c0_i32, %c0_i32_0 : i32, i32
  }
  func.func @transform_6(%arg0: i32) -> (i32, i32) {
    %c0_i32 = arith.constant 0 : i32
    %c0_i32_0 = arith.constant 0 : i32
    %c0_i32_1 = arith.constant 0 : i32
    return %c0_i32, %c0_i32_0 : i32, i32
  }
  func.func @transform_7(%arg0: i32) -> (i32, i32) {
    %c0_i32 = arith.constant 0 : i32
    %c0_i32_0 = arith.constant 0 : i32
    return %arg0, %c0_i32 : i32, i32
  }
}

</mosaic_0001>

<llo_original>
// kernel: tpu_custom_call.1
$region0: #{tpu_custom_call.1}
  #allocation0 [shape = 'u32[]', space=smem, size = 0x4, offset = 0x4, fixed_abs, tag = 'smem constant byte address 0x4 - core index']
  #allocation1 [shape = 'u32[144,128]{1,0:T(1,128)}', space=vmem, size = 0x12000, scoped, tag = 'internal scratch']
  %s0 = inlined_call_operand.vmem [shape: f32[16,256], index: 0, kind: input, shape index: {}]
  %s1 = inlined_call_operand.vmem [shape: bf16[256,128], index: 1, kind: input, shape index: {}]
  %s2 = inlined_call_operand.vmem [shape: f32[1,128], index: 2, kind: input, shape index: {}]
  %s3 = inlined_call_operand.vmem [shape: bf16[128,128], index: 3, kind: input, shape index: {}]
  %s4 = inlined_call_operand.vmem [shape: f32[1,128], index: 4, kind: input, shape index: {}]
  %s5 = inlined_call_operand.vmem [shape: bf16[128,784], index: 5, kind: input, shape index: {}]
  %s6 = inlined_call_operand.vmem [shape: f32[1,784], index: 6, kind: input, shape index: {}]
  %s7 = inlined_call_operand.hbm [shape: f32[16,784], index: 7, kind: output, shape index: {}]
  %s8 = sld [smem:[#allocation0]]
  $region38: #{tpu_custom_call.1} parent=0
    _
  %s10 = ssub.s32 1, %s8
  %s11 = scalar_select 0, %s10, %s8
  $region1: #{tpu_custom_call.1} parent=0
    #allocation2 [shape = 'u8[57344]{0}', space=vmem, size = 0xe000, scoped, tag = 'output window, operand 0, single buffered']
    #allocation3 [shape = 's32[1]{0}', space=sflag, size = 0x4, scoped, tag = 'scoped memory for tpu_custom_call.1']
    %12 = vsyncpa [#allocation3], 0
    // Predicated region
    $region2: #{tpu_custom_call.1} parent=1 // pred_check
      _
    $region3: #{tpu_custom_call.1} parent=1 // pred_check_branch
      %14 = sbr.rel (0) target = $region5
    $region4: #{tpu_custom_call.1} parent=1 // pred_region
      _
    $region5: #{tpu_custom_call.1} parent=1 // pred_fallthru
      _
    // Predicated region
    $region6: #{tpu_custom_call.1} parent=1 // pred_check
      _
    $region7: #{tpu_custom_call.1} parent=1 // pred_check_branch
      %16 = sbr.rel (0) target = $region9
    $region8: #{tpu_custom_call.1} parent=1 // pred_region
      _
    $region9: #{tpu_custom_call.1} parent=1 // pred_fallthru
      _
    // Predicated region
    $region10: #{tpu_custom_call.1} parent=1 // pred_check
      _
    $region11: #{tpu_custom_call.1} parent=1 // pred_check_branch
      %18 = sbr.rel (0) target = $region13
    $region12: #{tpu_custom_call.1} parent=1 // pred_region
      _
    $region13: #{tpu_custom_call.1} parent=1 // pred_fallthru
      _
    // Predicated region
    $region14: #{tpu_custom_call.1} parent=1 // pred_check
      _
    $region15: #{tpu_custom_call.1} parent=1 // pred_check_branch
      %20 = sbr.rel (0) target = $region17
    $region16: #{tpu_custom_call.1} parent=1 // pred_region
      _
    $region17: #{tpu_custom_call.1} parent=1 // pred_fallthru
      _
    // Predicated region
    $region18: #{tpu_custom_call.1} parent=1 // pred_check
      _
    $region19: #{tpu_custom_call.1} parent=1 // pred_check_branch
      %22 = sbr.rel (0) target = $region21
    $region20: #{tpu_custom_call.1} parent=1 // pred_region
      _
    $region21: #{tpu_custom_call.1} parent=1 // pred_fallthru
      _
    // Predicated region
    $region22: #{tpu_custom_call.1} parent=1 // pred_check
      _
    $region23: #{tpu_custom_call.1} parent=1 // pred_check_branch
      %24 = sbr.rel (0) target = $region25
    $region24: #{tpu_custom_call.1} parent=1 // pred_region
      _
    $region25: #{tpu_custom_call.1} parent=1 // pred_fallthru
      _
    // Predicated region
    $region26: #{tpu_custom_call.1} parent=1 // pred_check
      _
    $region27: #{tpu_custom_call.1} parent=1 // pred_check_branch
      %26 = sbr.rel (0) target = $region29
    $region28: #{tpu_custom_call.1} parent=1 // pred_region
      _
    $region29: #{tpu_custom_call.1} parent=1 // pred_fallthru
      _
    %v28 = vld [vmem:[%s0] sm:$0xff]
    %v29 = vld [vmem:[%s0 + $0x8] sm:$0xff]
    %v30 = vld [vmem:[%s0 + $0x10] sm:$0xff]
    %v31 = vld [vmem:[%s0 + $0x18] sm:$0xff]
    %v32 = vpack.c.bf16 %v30, %v28
    %v33 = vpack.c.bf16 %v31, %v29
    %v34 = vld [vmem:[%s1] sm:$0xf]
    %v35 = vld [vmem:[%s1 + $0x4] sm:$0xf]
    %v36 = vld [vmem:[%s1 + $0x8] sm:$0xf]
    %v37 = vld [vmem:[%s1 + $0xc] sm:$0xf]
    %v38 = vld [vmem:[%s1 + $0x10] sm:$0xf]
    %v39 = vld [vmem:[%s1 + $0x14] sm:$0xf]
    %v40 = vld [vmem:[%s1 + $0x18] sm:$0xf]
    %v41 = vld [vmem:[%s1 + $0x1c] sm:$0xf]
    %v42 = vld [vmem:[%s1 + $0x20] sm:$0xf]
    %v43 = vld [vmem:[%s1 + $0x24] sm:$0xf]
    %v44 = vld [vmem:[%s1 + $0x28] sm:$0xf]
    %v45 = vld [vmem:[%s1 + $0x2c] sm:$0xf]
    %v46 = vld [vmem:[%s1 + $0x30] sm:$0xf]
    %v47 = vld [vmem:[%s1 + $0x34] sm:$0xf]
    %v48 = vld [vmem:[%s1 + $0x38] sm:$0xf]
    %v49 = vld [vmem:[%s1 + $0x3c] sm:$0xf]
    %v50 = vld [vmem:[%s1 + $0x40] sm:$0xf]
    %v51 = vld [vmem:[%s1 + $0x44] sm:$0xf]
    %v52 = vld [vmem:[%s1 + $0x48] sm:$0xf]
    %v53 = vld [vmem:[%s1 + $0x4c] sm:$0xf]
    %v54 = vld [vmem:[%s1 + $0x50] sm:$0xf]
    %v55 = vld [vmem:[%s1 + $0x54] sm:$0xf]
    %v56 = vld [vmem:[%s1 + $0x58] sm:$0xf]
    %v57 = vld [vmem:[%s1 + $0x5c] sm:$0xf]
    %v58 = vld [vmem:[%s1 + $0x60] sm:$0xf]
    %v59 = vld [vmem:[%s1 + $0x64] sm:$0xf]
    %v60 = vld [vmem:[%s1 + $0x68] sm:$0xf]
    %v61 = vld [vmem:[%s1 + $0x6c] sm:$0xf]
    %v62 = vld [vmem:[%s1 + $0x70] sm:$0xf]
    %v63 = vld [vmem:[%s1 + $0x74] sm:$0xf]
    %v64 = vld [vmem:[%s1 + $0x78] sm:$0xf]
    %v65 = vld [vmem:[%s1 + $0x7c] sm:$0xf]
    %v66 = vld [vmem:[%s2] sm:$0x1]
    %v68 = vlaneseq
    %v69 = vshrl.u32 %v68, 7
    %v70 = vsub.s32 0, %v69
    %v71 = vrot.slane %v66, %v70
    %v105 = vunpack.c.l.b16 %v34
    %v106 = vunpack.c.l.b16 %v35
    %v107 = vunpack.c.l.b16 %v36
    %v108 = vunpack.c.l.b16 %v37
    %v109 = vunpack.c.l.b16 %v38
    %v110 = vunpack.c.l.b16 %v39
    %v111 = vunpack.c.l.b16 %v40
    %v112 = vunpack.c.l.b16 %v41
    %v113 = vunpack.c.l.b16 %v42
    %v114 = vunpack.c.l.b16 %v43
    %v115 = vunpack.c.l.b16 %v44
    %v116 = vunpack.c.l.b16 %v45
    %v117 = vunpack.c.l.b16 %v46
    %v118 = vunpack.c.l.b16 %v47
    %v119 = vunpack.c.l.b16 %v48
    %v120 = vunpack.c.l.b16 %v49
    %v121 = vunpack.c.l.b16 %v50
    %v122 = vunpack.c.l.b16 %v51
    %v123 = vunpack.c.l.b16 %v52
    %v124 = vunpack.c.l.b16 %v53
    %v125 = vunpack.c.l.b16 %v54
    %v126 = vunpack.c.l.b16 %v55
    %v127 = vunpack.c.l.b16 %v56
    %v128 = vunpack.c.l.b16 %v57
    %v129 = vunpack.c.l.b16 %v58
    %v130 = vunpack.c.l.b16 %v59
    %v131 = vunpack.c.l.b16 %v60
    %v132 = vunpack.c.l.b16 %v61
    %v133 = vunpack.c.l.b16 %v62
    %v134 = vunpack.c.l.b16 %v63
    %v135 = vunpack.c.l.b16 %v64
    %v136 = vunpack.c.l.b16 %v65
    %v137 = vpack.c.b16 %v106, %v105
    %v138 = vpack.c.b16 %v108, %v107
    %v139 = vpack.c.b16 %v110, %v109
    %v140 = vpack.c.b16 %v112, %v111
    %v141 = vpack.c.b16 %v114, %v113
    %v142 = vpack.c.b16 %v116, %v115
    %v143 = vpack.c.b16 %v118, %v117
    %v144 = vpack.c.b16 %v120, %v119
    %v145 = vpack.c.b16 %v122, %v121
    %v146 = vpack.c.b16 %v124, %v123
    %v147 = vpack.c.b16 %v126, %v125
    %v148 = vpack.c.b16 %v128, %v127
    %v149 = vpack.c.b16 %v130, %v129
    %v150 = vpack.c.b16 %v132, %v131
    %v151 = vpack.c.b16 %v134, %v133
    %v152 = vpack.c.b16 %v136, %v135
    %169 = vmatprep.subr.bf16.mxu0 0
    %170 = vmatpush1.bf16.msra.mxu0 %v144
    %171 = vmatprep.subr.bf16.mxu0 0
    %172 = vmatpush1.bf16.msra.mxu0 %v143
    %173 = vmatprep.subr.bf16.mxu0 0
    %174 = vmatpush1.bf16.msra.mxu0 %v142
    %175 = vmatprep.subr.bf16.mxu0 0
    %176 = vmatpush1.bf16.msra.mxu0 %v141
    %177 = vmatprep.subr.bf16.mxu0 0
    %178 = vmatpush1.bf16.msra.mxu0 %v140
    %179 = vmatprep.subr.bf16.mxu0 0
    %180 = vmatpush1.bf16.msra.mxu0 %v139
    %181 = vmatprep.subr.bf16.mxu0 0
    %182 = vmatpush1.bf16.msra.mxu0 %v138
    %183 = vmatprep.subr.bf16.mxu0 0
    %184 = vmatpush1.bf16.msra.mxu0 %v137
    %185 = vmatprep.subr.bf16.mxu0 0
    %186 = vmatpush2.bf16.msra.mxu0 %v152
    %187 = vmatprep.subr.bf16.mxu0 0
    %188 = vmatpush2.bf16.msra.mxu0 %v151
    %189 = vmatprep.subr.bf16.mxu0 0
    %190 = vmatpush2.bf16.msra.mxu0 %v150
    %191 = vmatprep.subr.bf16.mxu0 0
    %192 = vmatpush2.bf16.msra.mxu0 %v149
    %193 = vmatprep.subr.bf16.mxu0 0
    %194 = vmatpush2.bf16.msra.mxu0 %v148
    %195 = vmatprep.subr.bf16.mxu0 0
    %196 = vmatpush2.bf16.msra.mxu0 %v147
    %197 = vmatprep.subr.bf16.mxu0 0
    %198 = vmatpush2.bf16.msra.mxu0 %v146
    %199 = vmatprep.subr.bf16.mxu0 0
    %200 = vmatpush2.bf16.msra.mxu0 %v145
    %201 = vmatprep.mubr.bf16.mxu0 %v33
    %202 = vmatmul.mubr.bf16.gmra.mxu0 %v32
    %v203 = vpop.f32.mrf.mxu0
    %v204 = vadd.f32 %v71, %v203
    %v205 = vpop.f32.mrf.mxu0
    %v206 = vpop.f32.mrf.mxu0
    %v207 = vadd.f32 %v71, %v206
    %v208 = vpop.f32.mrf.mxu0
    %209 = vdwg.mxu0
    %vm210 = vcmp.gt.f32.partialorder %v204, 0.0
    %vm211 = vcmp.gt.f32.partialorder %v207, 0.0
    %v212 = vmul.f32 %v204, 0.1
    %v213 = vmul.f32 %v207, 0.1
    %v214 = vsel %vm210, %v204, %v212
    %v215 = vsel %vm211, %v207, %v213
    %v216 = vpack.c.bf16 %v215, %v214
    %v217 = vld [vmem:[%s3] sm:$0xf]
    %v218 = vld [vmem:[%s3 + $0x4] sm:$0xf]
    %v219 = vld [vmem:[%s3 + $0x8] sm:$0xf]
    %v220 = vld [vmem:[%s3 + $0xc] sm:$0xf]
    %v221 = vld [vmem:[%s3 + $0x10] sm:$0xf]
    %v222 = vld [vmem:[%s3 + $0x14] sm:$0xf]
    %v223 = vld [vmem:[%s3 + $0x18] sm:$0xf]
    %v224 = vld [vmem:[%s3 + $0x1c] sm:$0xf]
    %v225 = vld [vmem:[%s3 + $0x20] sm:$0xf]
    %v226 = vld [vmem:[%s3 + $0x24] sm:$0xf]
    %v227 = vld [vmem:[%s3 + $0x28] sm:$0xf]
    %v228 = vld [vmem:[%s3 + $0x2c] sm:$0xf]
    %v229 = vld [vmem:[%s3 + $0x30] sm:$0xf]
    %v230 = vld [vmem:[%s3 + $0x34] sm:$0xf]
    %v231 = vld [vmem:[%s3 + $0x38] sm:$0xf]
    %v232 = vld [vmem:[%s3 + $0x3c] sm:$0xf]
    %v233 = vld [vmem:[%s4] sm:$0x1]
    %v235 = vlaneseq
    %v236 = vshrl.u32 %v235, 7
    %v237 = vsub.s32 0, %v236
    %v238 = vrot.slane %v233, %v237
    %v256 = vunpack.c.l.b16 %v217
    %v257 = vunpack.c.l.b16 %v218
    %v258 = vunpack.c.l.b16 %v219
    %v259 = vunpack.c.l.b16 %v220
    %v260 = vunpack.c.l.b16 %v221
    %v261 = vunpack.c.l.b16 %v222
    %v262 = vunpack.c.l.b16 %v223
    %v263 = vunpack.c.l.b16 %v224
    %v264 = vunpack.c.l.b16 %v225
    %v265 = vunpack.c.l.b16 %v226
    %v266 = vunpack.c.l.b16 %v227
    %v267 = vunpack.c.l.b16 %v228
    %v268 = vunpack.c.l.b16 %v229
    %v269 = vunpack.c.l.b16 %v230
    %v270 = vunpack.c.l.b16 %v231
    %v271 = vunpack.c.l.b16 %v232
    %v272 = vpack.c.b16 %v257, %v256
    %v273 = vpack.c.b16 %v259, %v258
    %v274 = vpack.c.b16 %v261, %v260
    %v275 = vpack.c.b16 %v263, %v262
    %v276 = vpack.c.b16 %v265, %v264
    %v277 = vpack.c.b16 %v267, %v266
    %v278 = vpack.c.b16 %v269, %v268
    %v279 = vpack.c.b16 %v271, %v270
    %288 = vmatprep.subr.bf16.mxu0 0
    %289 = vmatpush1.bf16.msra.mxu0 %v279
    %290 = vmatprep.subr.bf16.mxu0 0
    %291 = vmatpush1.bf16.msra.mxu0 %v278
    %292 = vmatprep.subr.bf16.mxu0 0
    %293 = vmatpush1.bf16.msra.mxu0 %v277
    %294 = vmatprep.subr.bf16.mxu0 0
    %295 = vmatpush1.bf16.msra.mxu0 %v276
    %296 = vmatprep.subr.bf16.mxu0 0
    %297 = vmatpush1.bf16.msra.mxu0 %v275
    %298 = vmatprep.subr.bf16.mxu0 0
    %299 = vmatpush1.bf16.msra.mxu0 %v274
    %300 = vmatprep.subr.bf16.mxu0 0
    %301 = vmatpush1.bf16.msra.mxu0 %v273
    %302 = vmatprep.subr.bf16.mxu0 0
    %303 = vmatpush1.bf16.msra.mxu0 %v272
    %304 = vmatprep.subr.bf16.mxu0 0
    %305 = vmatpush2.bf16.msra.mxu0 0
    %306 = vmatprep.subr.bf16.mxu0 0
    %307 = vmatpush2.bf16.msra.mxu0 0
    %308 = vmatprep.subr.bf16.mxu0 0
    %309 = vmatpush2.bf16.msra.mxu0 0
    %310 = vmatprep.subr.bf16.mxu0 0
    %311 = vmatpush2.bf16.msra.mxu0 0
    %312 = vmatprep.subr.bf16.mxu0 0
    %313 = vmatpush2.bf16.msra.mxu0 0
    %314 = vmatprep.subr.bf16.mxu0 0
    %315 = vmatpush2.bf16.msra.mxu0 0
    %316 = vmatprep.subr.bf16.mxu0 0
    %317 = vmatpush2.bf16.msra.mxu0 0
    %318 = vmatprep.subr.bf16.mxu0 0
    %319 = vmatpush2.bf16.msra.mxu0 0
    %320 = vmatprep.mubr.bf16.mxu0 0
    %321 = vmatmul.mubr.bf16.gmra.mxu0 %v216
    %v322 = vpop.f32.mrf.mxu0
    %v323 = vadd.f32 %v238, %v322
    %v324 = vpop.f32.mrf.mxu0
    %v325 = vpop.f32.mrf.mxu0
    %v326 = vadd.f32 %v238, %v325
    %v327 = vpop.f32.mrf.mxu0
    %328 = vdwg.mxu0
    %vm329 = vcmp.gt.f32.partialorder %v323, 0.0
    %vm330 = vcmp.gt.f32.partialorder %v326, 0.0
    %v331 = vmul.f32 %v323, 0.1
    %v332 = vmul.f32 %v326, 0.1
    %v333 = vsel %vm329, %v323, %v331
    %v334 = vsel %vm330, %v326, %v332
    %v335 = vpack.c.bf16 %v334, %v333
    %v336 = vld [vmem:[%s5] sm:$0xff]
    %v337 = vld [vmem:[%s5 + $0x8] sm:$0xff]
    %v338 = vld [vmem:[%s5 + $0x10] sm:$0xff]
    %v339 = vld [vmem:[%s5 + $0x18] sm:$0xf]
    %v340 = vld [vmem:[%s5 + $0x1c] sm:$0xff]
    %v341 = vld [vmem:[%s5 + $0x24] sm:$0xff]
    %v342 = vld [vmem:[%s5 + $0x2c] sm:$0xff]
    %v343 = vld [vmem:[%s5 + $0x34] sm:$0xf]
    %v344 = vld [vmem:[%s5 + $0x38] sm:$0xff]
    %v345 = vld [vmem:[%s5 + $0x40] sm:$0xff]
    %v346 = vld [vmem:[%s5 + $0x48] sm:$0xff]
    %v347 = vld [vmem:[%s5 + $0x50] sm:$0xf]
    %v348 = vld [vmem:[%s5 + $0x54] sm:$0xff]
    %v349 = vld [vmem:[%s5 + $0x5c] sm:$0xff]
    %v350 = vld [vmem:[%s5 + $0x64] sm:$0xff]
    %v351 = vld [vmem:[%s5 + $0x6c] sm:$0xf]
    %v352 = vld [vmem:[%s5 + $0x70] sm:$0xff]
    %v353 = vld [vmem:[%s5 + $0x78] sm:$0xff]
    %v354 = vld [vmem:[%s5 + $0x80] sm:$0xff]
    %v355 = vld [vmem:[%s5 + $0x88] sm:$0xf]
    %v356 = vld [vmem:[%s5 + $0x8c] sm:$0xff]
    %v357 = vld [vmem:[%s5 + $0x94] sm:$0xff]
    %v358 = vld [vmem:[%s5 + $0x9c] sm:$0xff]
    %v359 = vld [vmem:[%s5 + $0xa4] sm:$0xf]
    %v360 = vld [vmem:[%s5 + $0xa8] sm:$0xff]
    %v361 = vld [vmem:[%s5 + $0xb0] sm:$0xff]
    %v362 = vld [vmem:[%s5 + $0xb8] sm:$0xff]
    %v363 = vld [vmem:[%s5 + $0xc0] sm:$0xf]
    %v364 = vld [vmem:[%s5 + $0xc4] sm:$0xff]
    %v365 = vld [vmem:[%s5 + $0xcc] sm:$0xff]
    %v366 = vld [vmem:[%s5 + $0xd4] sm:$0xff]
    %v367 = vld [vmem:[%s5 + $0xdc] sm:$0xf]
    %v368 = vld [vmem:[%s5 + $0xe0] sm:$0xff]
    %v369 = vld [vmem:[%s5 + $0xe8] sm:$0xff]
    %v370 = vld [vmem:[%s5 + $0xf0] sm:$0xff]
    %v371 = vld [vmem:[%s5 + $0xf8] sm:$0xf]
    %v372 = vld [vmem:[%s5 + $0xfc] sm:$0xff]
    %v373 = vld [vmem:[%s5 + $0x104] sm:$0xff]
    %v374 = vld [vmem:[%s5 + $0x10c] sm:$0xff]
    %v375 = vld [vmem:[%s5 + $0x114] sm:$0xf]
    %v376 = vld [vmem:[%s5 + $0x118] sm:$0xff]
    %v377 = vld [vmem:[%s5 + $0x120] sm:$0xff]
    %v378 = vld [vmem:[%s5 + $0x128] sm:$0xff]
    %v379 = vld [vmem:[%s5 + $0x130] sm:$0xf]
    %v380 = vld [vmem:[%s5 + $0x134] sm:$0xff]
    %v381 = vld [vmem:[%s5 + $0x13c] sm:$0xff]
    %v382 = vld [vmem:[%s5 + $0x144] sm:$0xff]
    %v383 = vld [vmem:[%s5 + $0x14c] sm:$0xf]
    %v384 = vld [vmem:[%s5 + $0x150] sm:$0xff]
    %v385 = vld [vmem:[%s5 + $0x158] sm:$0xff]
    %v386 = vld [vmem:[%s5 + $0x160] sm:$0xff]
    %v387 = vld [vmem:[%s5 + $0x168] sm:$0xf]
    %v388 = vld [vmem:[%s5 + $0x16c] sm:$0xff]
    %v389 = vld [vmem:[%s5 + $0x174] sm:$0xff]
    %v390 = vld [vmem:[%s5 + $0x17c] sm:$0xff]
    %v391 = vld [vmem:[%s5 + $0x184] sm:$0xf]
    %v392 = vld [vmem:[%s5 + $0x188] sm:$0xff]
    %v393 = vld [vmem:[%s5 + $0x190] sm:$0xff]
    %v394 = vld [vmem:[%s5 + $0x198] sm:$0xff]
    %v395 = vld [vmem:[%s5 + $0x1a0] sm:$0xf]
    %v396 = vld [vmem:[%s5 + $0x1a4] sm:$0xff]
    %v397 = vld [vmem:[%s5 + $0x1ac] sm:$0xff]
    %v398 = vld [vmem:[%s5 + $0x1b4] sm:$0xff]
    %v399 = vld [vmem:[%s5 + $0x1bc] sm:$0xf]
    %v400 = vld [vmem:[%s6] sm:$0x7f]
    %v402 = vlaneseq
    %v403 = vshrl.u32 %v402, 7
    %v404 = vsub.s32 0, %v403
    %v405 = vrot.slane %v400, %v404
    %v406 = vlaneseq
    %v407 = vshrl.u32 %v406, 7
    %v408 = vsub.s32 1, %v407
    %v409 = vrot.slane %v400, %v408
    %v410 = vlaneseq
    %v411 = vshrl.u32 %v410, 7
    %v412 = vsub.s32 2, %v411
    %v413 = vrot.slane %v400, %v412
    %v414 = vlaneseq
    %v415 = vshrl.u32 %v414, 7
    %v416 = vsub.s32 3, %v415
    %v417 = vrot.slane %v400, %v416
    %v418 = vlaneseq
    %v419 = vshrl.u32 %v418, 7
    %v420 = vsub.s32 4, %v419
    %v421 = vrot.slane %v400, %v420
    %v422 = vlaneseq
    %v423 = vshrl.u32 %v422, 7
    %v424 = vsub.s32 5, %v423
    %v425 = vrot.slane %v400, %v424
    %v426 = vlaneseq
    %v427 = vshrl.u32 %v426, 7
    %v428 = vsub.s32 6, %v427
    %v429 = vrot.slane %v400, %v428
    %v501 = vunpack.c.l.b16 %v336
    %v502 = vunpack.c.h.b16 %v336
    %v503 = vunpack.c.l.b16 %v337
    %v504 = vunpack.c.h.b16 %v337
    %v505 = vunpack.c.l.b16 %v338
    %v506 = vunpack.c.h.b16 %v338
    %v507 = vunpack.c.l.b16 %v339
    %v508 = vunpack.c.l.b16 %v340
    %v509 = vunpack.c.h.b16 %v340
    %v510 = vunpack.c.l.b16 %v341
    %v511 = vunpack.c.h.b16 %v341
    %v512 = vunpack.c.l.b16 %v342
    %v513 = vunpack.c.h.b16 %v342
    %v514 = vunpack.c.l.b16 %v343
    %v515 = vunpack.c.l.b16 %v344
    %v516 = vunpack.c.h.b16 %v344
    %v517 = vunpack.c.l.b16 %v345
    %v518 = vunpack.c.h.b16 %v345
    %v519 = vunpack.c.l.b16 %v346
    %v520 = vunpack.c.h.b16 %v346
    %v521 = vunpack.c.l.b16 %v347
    %v522 = vunpack.c.l.b16 %v348
    %v523 = vunpack.c.h.b16 %v348
    %v524 = vunpack.c.l.b16 %v349
    %v525 = vunpack.c.h.b16 %v349
    %v526 = vunpack.c.l.b16 %v350
    %v527 = vunpack.c.h.b16 %v350
    %v528 = vunpack.c.l.b16 %v351
    %v529 = vunpack.c.l.b16 %v352
    %v530 = vunpack.c.h.b16 %v352
    %v531 = vunpack.c.l.b16 %v353
    %v532 = vunpack.c.h.b16 %v353
    %v533 = vunpack.c.l.b16 %v354
    %v534 = vunpack.c.h.b16 %v354
    %v535 = vunpack.c.l.b16 %v355
    %v536 = vunpack.c.l.b16 %v356
    %v537 = vunpack.c.h.b16 %v356
    %v538 = vunpack.c.l.b16 %v357
    %v539 = vunpack.c.h.b16 %v357
    %v540 = vunpack.c.l.b16 %v358
    %v541 = vunpack.c.h.b16 %v358
    %v542 = vunpack.c.l.b16 %v359
    %v543 = vunpack.c.l.b16 %v360
    %v544 = vunpack.c.h.b16 %v360
    %v545 = vunpack.c.l.b16 %v361
    %v546 = vunpack.c.h.b16 %v361
    %v547 = vunpack.c.l.b16 %v362
    %v548 = vunpack.c.h.b16 %v362
    %v549 = vunpack.c.l.b16 %v363
    %v550 = vunpack.c.l.b16 %v364
    %v551 = vunpack.c.h.b16 %v364
    %v552 = vunpack.c.l.b16 %v365
    %v553 = vunpack.c.h.b16 %v365
    %v554 = vunpack.c.l.b16 %v366
    %v555 = vunpack.c.h.b16 %v366
    %v556 = vunpack.c.l.b16 %v367
    %v557 = vunpack.c.l.b16 %v368
    %v558 = vunpack.c.h.b16 %v368
    %v559 = vunpack.c.l.b16 %v369
    %v560 = vunpack.c.h.b16 %v369
    %v561 = vunpack.c.l.b16 %v370
    %v562 = vunpack.c.h.b16 %v370
    %v563 = vunpack.c.l.b16 %v371
    %v564 = vunpack.c.l.b16 %v372
    %v565 = vunpack.c.h.b16 %v372
    %v566 = vunpack.c.l.b16 %v373
    %v567 = vunpack.c.h.b16 %v373
    %v568 = vunpack.c.l.b16 %v374
    %v569 = vunpack.c.h.b16 %v374
    %v570 = vunpack.c.l.b16 %v375
    %v571 = vunpack.c.l.b16 %v376
    %v572 = vunpack.c.h.b16 %v376
    %v573 = vunpack.c.l.b16 %v377
    %v574 = vunpack.c.h.b16 %v377
    %v575 = vunpack.c.l.b16 %v378
    %v576 = vunpack.c.h.b16 %v378
    %v577 = vunpack.c.l.b16 %v379
    %v578 = vunpack.c.l.b16 %v380
    %v579 = vunpack.c.h.b16 %v380
    %v580 = vunpack.c.l.b16 %v381
    %v581 = vunpack.c.h.b16 %v381
    %v582 = vunpack.c.l.b16 %v382
    %v583 = vunpack.c.h.b16 %v382
    %v584 = vunpack.c.l.b16 %v383
    %v585 = vunpack.c.l.b16 %v384
    %v586 = vunpack.c.h.b16 %v384
    %v587 = vunpack.c.l.b16 %v385
    %v588 = vunpack.c.h.b16 %v385
    %v589 = vunpack.c.l.b16 %v386
    %v590 = vunpack.c.h.b16 %v386
    %v591 = vunpack.c.l.b16 %v387
    %v592 = vunpack.c.l.b16 %v388
    %v593 = vunpack.c.h.b16 %v388
    %v594 = vunpack.c.l.b16 %v389
    %v595 = vunpack.c.h.b16 %v389
    %v596 = vunpack.c.l.b16 %v390
    %v597 = vunpack.c.h.b16 %v390
    %v598 = vunpack.c.l.b16 %v391
    %v599 = vunpack.c.l.b16 %v392
    %v600 = vunpack.c.h.b16 %v392
    %v601 = vunpack.c.l.b16 %v393
    %v602 = vunpack.c.h.b16 %v393
    %v603 = vunpack.c.l.b16 %v394
    %v604 = vunpack.c.h.b16 %v394
    %v605 = vunpack.c.l.b16 %v395
    %v606 = vunpack.c.l.b16 %v396
    %v607 = vunpack.c.h.b16 %v396
    %v608 = vunpack.c.l.b16 %v397
    %v609 = vunpack.c.h.b16 %v397
    %v610 = vunpack.c.l.b16 %v398
    %v611 = vunpack.c.h.b16 %v398
    %v612 = vunpack.c.l.b16 %v399
    %v613 = vpack.c.b16 %v508, %v501
    %v614 = vpack.c.b16 %v509, %v502
    %v615 = vpack.c.b16 %v510, %v503
    %v616 = vpack.c.b16 %v511, %v504
    %v617 = vpack.c.b16 %v512, %v505
    %v618 = vpack.c.b16 %v513, %v506
    %v619 = vpack.c.b16 %v514, %v507
    %v620 = vpack.c.b16 %v522, %v515
    %v621 = vpack.c.b16 %v523, %v516
    %v622 = vpack.c.b16 %v524, %v517
    %v623 = vpack.c.b16 %v525, %v518
    %v624 = vpack.c.b16 %v526, %v519
    %v625 = vpack.c.b16 %v527, %v520
    %v626 = vpack.c.b16 %v528, %v521
    %v627 = vpack.c.b16 %v536, %v529
    %v628 = vpack.c.b16 %v537, %v530
    %v629 = vpack.c.b16 %v538, %v531
    %v630 = vpack.c.b16 %v539, %v532
    %v631 = vpack.c.b16 %v540, %v533
    %v632 = vpack.c.b16 %v541, %v534
    %v633 = vpack.c.b16 %v542, %v535
    %v634 = vpack.c.b16 %v550, %v543
    %v635 = vpack.c.b16 %v551, %v544
    %v636 = vpack.c.b16 %v552, %v545
    %v637 = vpack.c.b16 %v553, %v546
    %v638 = vpack.c.b16 %v554, %v547
    %v639 = vpack.c.b16 %v555, %v548
    %v640 = vpack.c.b16 %v556, %v549
    %v641 = vpack.c.b16 %v564, %v557
    %v642 = vpack.c.b16 %v565, %v558
    %v643 = vpack.c.b16 %v566, %v559
    %v644 = vpack.c.b16 %v567, %v560
    %v645 = vpack.c.b16 %v568, %v561
    %v646 = vpack.c.b16 %v569, %v562
    %v647 = vpack.c.b16 %v570, %v563
    %v648 = vpack.c.b16 %v578, %v571
    %v649 = vpack.c.b16 %v579, %v572
    %v650 = vpack.c.b16 %v580, %v573
    %v651 = vpack.c.b16 %v581, %v574
    %v652 = vpack.c.b16 %v582, %v575
    %v653 = vpack.c.b16 %v583, %v576
    %v654 = vpack.c.b16 %v584, %v577
    %v655 = vpack.c.b16 %v592, %v585
    %v656 = vpack.c.b16 %v593, %v586
    %v657 = vpack.c.b16 %v594, %v587
    %v658 = vpack.c.b16 %v595, %v588
    %v659 = vpack.c.b16 %v596, %v589
    %v660 = vpack.c.b16 %v597, %v590
    %v661 = vpack.c.b16 %v598, %v591
    %v662 = vpack.c.b16 %v606, %v599
    %v663 = vpack.c.b16 %v607, %v600
    %v664 = vpack.c.b16 %v608, %v601
    %v665 = vpack.c.b16 %v609, %v602
    %v666 = vpack.c.b16 %v610, %v603
    %v667 = vpack.c.b16 %v611, %v604
    %v668 = vpack.c.b16 %v612, %v605
    %725 = vmatprep.subr.bf16.mxu0 %v663
    %726 = vmatpush1.bf16.msra.mxu0 %v662
    %727 = vmatprep.subr.bf16.mxu0 %v656
    %728 = vmatpush1.bf16.msra.mxu0 %v655
    %729 = vmatprep.subr.bf16.mxu0 %v649
    %730 = vmatpush1.bf16.msra.mxu0 %v648
    %731 = vmatprep.subr.bf16.mxu0 %v642
    %732 = vmatpush1.bf16.msra.mxu0 %v641
    %733 = vmatprep.subr.bf16.mxu0 %v635
    %734 = vmatpush1.bf16.msra.mxu0 %v634
    %735 = vmatprep.subr.bf16.mxu0 %v628
    %736 = vmatpush1.bf16.msra.mxu0 %v627
    %737 = vmatprep.subr.bf16.mxu0 %v621
    %738 = vmatpush1.bf16.msra.mxu0 %v620
    %739 = vmatprep.subr.bf16.mxu0 %v614
    %740 = vmatpush1.bf16.msra.mxu0 %v613
    %741 = vmatprep.subr.bf16.mxu0 0
    %742 = vmatpush2.bf16.msra.mxu0 0
    %743 = vmatprep.subr.bf16.mxu0 0
    %744 = vmatpush2.bf16.msra.mxu0 0
    %745 = vmatprep.subr.bf16.mxu0 0
    %746 = vmatpush2.bf16.msra.mxu0 0
    %747 = vmatprep.subr.bf16.mxu0 0
    %748 = vmatpush2.bf16.msra.mxu0 0
    %749 = vmatprep.subr.bf16.mxu0 0
    %750 = vmatpush2.bf16.msra.mxu0 0
    %751 = vmatprep.subr.bf16.mxu0 0
    %752 = vmatpush2.bf16.msra.mxu0 0
    %753 = vmatprep.subr.bf16.mxu0 0
    %754 = vmatpush2.bf16.msra.mxu0 0
    %755 = vmatprep.subr.bf16.mxu0 0
    %756 = vmatpush2.bf16.msra.mxu0 0
    %757 = vmatprep.mubr.bf16.mxu0 0
    %758 = vmatmul.mubr.bf16.gmra.mxu0 %v335
    %v759 = vpop.f32.mrf.mxu0
    %v760 = vadd.f32 %v405, %v759
    %v761 = vpop.f32.mrf.mxu0
    %v762 = vadd.f32 %v409, %v761
    %v763 = vpop.f32.mrf.mxu0
    %v764 = vadd.f32 %v405, %v763
    %v765 = vpop.f32.mrf.mxu0
    %v766 = vadd.f32 %v409, %v765
    %767 = vdwg.mxu0
    %768 = vmatprep.subr.bf16.mxu0 %v665
    %769 = vmatpush1.bf16.msra.mxu0 %v664
    %770 = vmatprep.subr.bf16.mxu0 %v658
    %771 = vmatpush1.bf16.msra.mxu0 %v657
    %772 = vmatprep.subr.bf16.mxu0 %v651
    %773 = vmatpush1.bf16.msra.mxu0 %v650
    %774 = vmatprep.subr.bf16.mxu0 %v644
    %775 = vmatpush1.bf16.msra.mxu0 %v643
    %776 = vmatprep.subr.bf16.mxu0 %v637
    %777 = vmatpush1.bf16.msra.mxu0 %v636
    %778 = vmatprep.subr.bf16.mxu0 %v630
    %779 = vmatpush1.bf16.msra.mxu0 %v629
    %780 = vmatprep.subr.bf16.mxu0 %v623
    %781 = vmatpush1.bf16.msra.mxu0 %v622
    %782 = vmatprep.subr.bf16.mxu0 %v616
    %783 = vmatpush1.bf16.msra.mxu0 %v615
    %784 = vmatprep.subr.bf16.mxu0 0
    %785 = vmatpush2.bf16.msra.mxu0 0
    %786 = vmatprep.subr.bf16.mxu0 0
    %787 = vmatpush2.bf16.msra.mxu0 0
    %788 = vmatprep.subr.bf16.mxu0 0
    %789 = vmatpush2.bf16.msra.mxu0 0
    %790 = vmatprep.subr.bf16.mxu0 0
    %791 = vmatpush2.bf16.msra.mxu0 0
    %792 = vmatprep.subr.bf16.mxu0 0
    %793 = vmatpush2.bf16.msra.mxu0 0
    %794 = vmatprep.subr.bf16.mxu0 0
    %795 = vmatpush2.bf16.msra.mxu0 0
    %796 = vmatprep.subr.bf16.mxu0 0
    %797 = vmatpush2.bf16.msra.mxu0 0
    %798 = vmatprep.subr.bf16.mxu0 0
    %799 = vmatpush2.bf16.msra.mxu0 0
    %800 = vmatprep.mubr.bf16.mxu0 0
    %801 = vmatmul.mubr.bf16.gmra.mxu0 %v335
    %v802 = vpop.f32.mrf.mxu0
    %v803 = vadd.f32 %v413, %v802
    %v804 = vpop.f32.mrf.mxu0
    %v805 = vadd.f32 %v417, %v804
    %v806 = vpop.f32.mrf.mxu0
    %v807 = vadd.f32 %v413, %v806
    %v808 = vpop.f32.mrf.mxu0
    %v809 = vadd.f32 %v417, %v808
    %810 = vdwg.mxu0
    %811 = vmatprep.subr.bf16.mxu0 %v667
    %812 = vmatpush1.bf16.msra.mxu0 %v666
    %813 = vmatprep.subr.bf16.mxu0 %v660
    %814 = vmatpush1.bf16.msra.mxu0 %v659
    %815 = vmatprep.subr.bf16.mxu0 %v653
    %816 = vmatpush1.bf16.msra.mxu0 %v652
    %817 = vmatprep.subr.bf16.mxu0 %v646
    %818 = vmatpush1.bf16.msra.mxu0 %v645
    %819 = vmatprep.subr.bf16.mxu0 %v639
    %820 = vmatpush1.bf16.msra.mxu0 %v638
    %821 = vmatprep.subr.bf16.mxu0 %v632
    %822 = vmatpush1.bf16.msra.mxu0 %v631
    %823 = vmatprep.subr.bf16.mxu0 %v625
    %824 = vmatpush1.bf16.msra.mxu0 %v624
    %825 = vmatprep.subr.bf16.mxu0 %v618
    %826 = vmatpush1.bf16.msra.mxu0 %v617
    %827 = vmatprep.subr.bf16.mxu0 0
    %828 = vmatpush2.bf16.msra.mxu0 0
    %829 = vmatprep.subr.bf16.mxu0 0
    %830 = vmatpush2.bf16.msra.mxu0 0
    %831 = vmatprep.subr.bf16.mxu0 0
    %832 = vmatpush2.bf16.msra.mxu0 0
    %833 = vmatprep.subr.bf16.mxu0 0
    %834 = vmatpush2.bf16.msra.mxu0 0
    %835 = vmatprep.subr.bf16.mxu0 0
    %836 = vmatpush2.bf16.msra.mxu0 0
    %837 = vmatprep.subr.bf16.mxu0 0
    %838 = vmatpush2.bf16.msra.mxu0 0
    %839 = vmatprep.subr.bf16.mxu0 0
    %840 = vmatpush2.bf16.msra.mxu0 0
    %841 = vmatprep.subr.bf16.mxu0 0
    %842 = vmatpush2.bf16.msra.mxu0 0
    %843 = vmatprep.mubr.bf16.mxu0 0
    %844 = vmatmul.mubr.bf16.gmra.mxu0 %v335
    %v845 = vpop.f32.mrf.mxu0
    %v846 = vadd.f32 %v421, %v845
    %v847 = vpop.f32.mrf.mxu0
    %v848 = vadd.f32 %v425, %v847
    %v849 = vpop.f32.mrf.mxu0
    %v850 = vadd.f32 %v421, %v849
    %v851 = vpop.f32.mrf.mxu0
    %v852 = vadd.f32 %v425, %v851
    %853 = vdwg.mxu0
    %854 = vmatprep.subr.bf16.mxu0 0
    %855 = vmatpush1.bf16.msra.mxu0 %v668
    %856 = vmatprep.subr.bf16.mxu0 0
    %857 = vmatpush1.bf16.msra.mxu0 %v661
    %858 = vmatprep.subr.bf16.mxu0 0
    %859 = vmatpush1.bf16.msra.mxu0 %v654
    %860 = vmatprep.subr.bf16.mxu0 0
    %861 = vmatpush1.bf16.msra.mxu0 %v647
    %862 = vmatprep.subr.bf16.mxu0 0
    %863 = vmatpush1.bf16.msra.mxu0 %v640
    %864 = vmatprep.subr.bf16.mxu0 0
    %865 = vmatpush1.bf16.msra.mxu0 %v633
    %866 = vmatprep.subr.bf16.mxu0 0
    %867 = vmatpush1.bf16.msra.mxu0 %v626
    %868 = vmatprep.subr.bf16.mxu0 0
    %869 = vmatpush1.bf16.msra.mxu0 %v619
    %870 = vmatprep.subr.bf16.mxu0 0
    %871 = vmatpush2.bf16.msra.mxu0 0
    %872 = vmatprep.subr.bf16.mxu0 0
    %873 = vmatpush2.bf16.msra.mxu0 0
    %874 = vmatprep.subr.bf16.mxu0 0
    %875 = vmatpush2.bf16.msra.mxu0 0
    %876 = vmatprep.subr.bf16.mxu0 0
    %877 = vmatpush2.bf16.msra.mxu0 0
    %878 = vmatprep.subr.bf16.mxu0 0
    %879 = vmatpush2.bf16.msra.mxu0 0
    %880 = vmatprep.subr.bf16.mxu0 0
    %881 = vmatpush2.bf16.msra.mxu0 0
    %882 = vmatprep.subr.bf16.mxu0 0
    %883 = vmatpush2.bf16.msra.mxu0 0
    %884 = vmatprep.subr.bf16.mxu0 0
    %885 = vmatpush2.bf16.msra.mxu0 0
    %886 = vmatprep.mubr.bf16.mxu0 0
    %887 = vmatmul.mubr.bf16.gmra.mxu0 %v335
    %v888 = vpop.f32.mrf.mxu0
    %v889 = vadd.f32 %v429, %v888
    %v890 = vpop.f32.mrf.mxu0
    %v891 = vpop.f32.mrf.mxu0
    %v892 = vadd.f32 %v429, %v891
    %v893 = vpop.f32.mrf.mxu0
    %894 = vdwg.mxu0
    %v895 = vtanh.pop %v760
    %v896 = vtanh.pop %v762
    %v897 = vtanh.pop %v803
    %v898 = vtanh.pop %v805
    %v899 = vtanh.pop %v846
    %v900 = vtanh.pop %v848
    %v901 = vtanh.pop %v889
    %v902 = vtanh.pop %v764
    %v903 = vtanh.pop %v766
    %v904 = vtanh.pop %v807
    %v905 = vtanh.pop %v809
    %v906 = vtanh.pop %v850
    %v907 = vtanh.pop %v852
    %v908 = vtanh.pop %v892
    %909 = vst [vmem:[#allocation2] sm:$0xff] %v895
    %910 = vst [vmem:[#allocation2 + $0x8] sm:$0xff] %v896
    %911 = vst [vmem:[#allocation2 + $0x10] sm:$0xff] %v897
    %912 = vst [vmem:[#allocation2 + $0x18] sm:$0xff] %v898
    %913 = vst [vmem:[#allocation2 + $0x20] sm:$0xff] %v899
    %914 = vst [vmem:[#allocation2 + $0x28] sm:$0xff] %v900
    %vm915 = vcmask 130048
    %916 = vst.msk [vmem:[#allocation2 + $0x30] sm:$0xff] %vm915, %v901
    %917 = vst [vmem:[#allocation2 + $0x38] sm:$0xff] %v902
    %918 = vst [vmem:[#allocation2 + $0x40] sm:$0xff] %v903
    %919 = vst [vmem:[#allocation2 + $0x48] sm:$0xff] %v904
    %920 = vst [vmem:[#allocation2 + $0x50] sm:$0xff] %v905
    %921 = vst [vmem:[#allocation2 + $0x58] sm:$0xff] %v906
    %922 = vst [vmem:[#allocation2 + $0x60] sm:$0xff] %v907
    %923 = vst.msk [vmem:[#allocation2 + $0x68] sm:$0xff] %vm915, %v908
    // Predicated region
    $region30: #{tpu_custom_call.1} parent=1 // pred_check
      _
    $region31: #{tpu_custom_call.1} parent=1 // pred_check_branch
      %925 = sbr.rel (0) target = $region33
    $region32: #{tpu_custom_call.1} parent=1 // pred_region
      %s927 = ssub.s32 1792, 1792
      %928 = vsyncadd [#allocation3], %s927
      %s929 = sshll.u32 [#allocation2], 4
      %s930 = int_to_ptr.vmem [resolvable:$true] %s929
      %935 = dma.vmem_to_hbm [thread:$0]  %s930, 1792, %s7, [#allocation3], 896, 896, 56
    $region33: #{tpu_custom_call.1} parent=1 // pred_fallthru
      _
    // Predicated region
    $region34: #{tpu_custom_call.1} parent=1 // pred_check
      _
    $region35: #{tpu_custom_call.1} parent=1 // pred_check_branch
      %937 = sbr.rel (0) target = $region37
    $region36: #{tpu_custom_call.1} parent=1 // pred_region
      %938 = dma.done [#allocation3], 1792
    $region37: #{tpu_custom_call.1} parent=1 // pred_fallthru
      _
    %939 = vsyncpa [#allocation3], 1

</llo_original>
